<compile_context>
chip_gen: v5e
topology: v5e:2x2
jax: 0.10.0
libtpu: 0.0.40
codegen_flags: <defaults>
</compile_context>

<pallas_src>
import functools

import jax
import jax.numpy as jnp
from jax import lax
from jax.experimental import pallas as pl
from jax.experimental.pallas import tpu as pltpu


FILTER_SIZE = 128
NUM_ENCODING_FUNCTIONS = 6
D_IN = 3 + 3 * 2 * NUM_ENCODING_FUNCTIONS  # 39
D_OUT = 4
MAX_TILE_N = 8192  # review: v7x VMEM (64 MiB/TC) caps the tile around here.


def _nerf_mlp_kernel(x_ref, w1_ref, b1_ref, w2_ref, b2_ref, w3_ref, b3_ref, ot_ref):
    # x tile: (tile_n, D_IN) f32 -> bf16 for the MXU.
    x = x_ref[...].astype(jnp.bfloat16)

    # layer1 + relu  (accumulate / bias / ReLU in f32)
    h = jnp.dot(x, w1_ref[...], preferred_element_type=jnp.float32)
    h = jnp.maximum(h + b1_ref[...], 0.0)

    # layer2 + relu
    h = jnp.dot(h.astype(jnp.bfloat16), w2_ref[...],
                preferred_element_type=jnp.float32)
    h = jnp.maximum(h + b2_ref[...], 0.0)

    # layer3 (no activation), computed in transposed orientation via a
    # dot_general that contracts the last dims of BOTH operands:
    #   (D_OUT, F) x (tile_n, F) -> (D_OUT, tile_n)
    # No `.T` is materialized, so no (tile_n,128) XLU transpose competes with
    # the MXU pushes, and the output block stays lane-dense.
    out_t = lax.dot_general(
        w3_ref[...], h.astype(jnp.bfloat16),
        dimension_numbers=(((1,), (1,)), ((), ())),
        preferred_element_type=jnp.float32,
    ) + b3_ref[...]
    ot_ref[...] = out_t.astype(ot_ref.dtype)


def _pick_tile_n(n, max_tile=MAX_TILE_N):
    """Row tile: multiple of 128, <= max_tile, and sized so the grid has at
    least 2 steps (v7x has 2 TensorCores sharding the parallel axis) while
    never exceeding ~half the problem (no large padded-row waste)."""
    half = -(-n // 2)                     # cdiv(n, 2)
    tile = -(-half // 128) * 128          # round up to a multiple of 128
    return max(128, min(max_tile, tile))


@functools.partial(jax.jit, static_argnames=("tile_n", "lane_dense_output"))
def very_tiny_nerf_forward(x, params, *, tile_n=None, lane_dense_output=False):
    """x: [N, D_IN] float32.  Returns [N, 4] f32 (or [4, N] if lane_dense_output)."""
    n, d_in = x.shape
    assert d_in == D_IN

    if tile_n is None:
        tile_n = _pick_tile_n(n)
    assert tile_n % 128 == 0

    w1, b1 = params["w1"], params["b1"]  # (D_IN, F) bf16,  (1, F) f32
    w2, b2 = params["w2"], params["b2"]  # (F, F)   bf16,  (1, F) f32
    w3, b3 = params["w3"], params["b3"]  # (D_OUT, F) bf16, (D_OUT, 1) f32
    f = w1.shape[1]

    # Ragged last block: no wrapper-side jnp.pad copy of x.  Out-of-bounds
    # rows in the last tile hold unspecified data, but rows are independent
    # and the edge output block's writeback is masked by Pallas.
    grid = (pl.cdiv(n, tile_n),)
    full = lambda shape: pl.BlockSpec(shape, lambda i: (0, 0))

    weight_bytes = (w1.size + w2.size + w3.size) * 2 + (b1.size + b2.size + b3.size) * 4
    cost = pl.CostEstimate(
        flops=2 * n * (D_IN * f + f * f + f * D_OUT),
        transcendentals=0,
        bytes_accessed=n * D_IN * 4 + n * D_OUT * 4 + weight_bytes,
    )

    out_t = pl.pallas_call(
        _nerf_mlp_kernel,
        out_shape=jax.ShapeDtypeStruct((D_OUT, n), x.dtype),
        grid_spec=pltpu.PrefetchScalarGridSpec(
            num_scalar_prefetch=0,
            grid=grid,
            in_specs=[
                pl.BlockSpec((tile_n, D_IN), lambda i: (i, 0)),  # x tile
                full((D_IN, f)), full((1, f)),                   # layer1
                full((f, f)),    full((1, f)),                   # layer2
                full((D_OUT, f)), full((D_OUT, 1)),              # layer3
            ],
            out_specs=pl.BlockSpec((D_OUT, tile_n), lambda i: (0, i)),
        ),
        compiler_params=pltpu.CompilerParams(
            dimension_semantics=("parallel",),
            vmem_limit_bytes=48 * 1024 * 1024,
        ),
        cost_estimate=cost,
    )(x, w1, b1, w2, b2, w3, b3)

    if lane_dense_output:
        return out_t                     # (4, N), lane-dense; no extra HBM pass.
    return out_t.T                       # (N, 4), matches the PyTorch module.


def init_params(key, filter_size=FILTER_SIZE):
    """torch.nn.Linear-style init (U[-1/sqrt(fan_in), 1/sqrt(fan_in)]).

    w1/w2 stored transposed as (in, out); w3 stored as (out, in) because the
    kernel computes the last layer in transposed orientation.  Weights are
    bf16 (MXU-native); biases stay f32."""
    ks = jax.random.split(key, 6)

    def unif(k, shape, fan_in):
        bound = 1.0 / float(fan_in) ** 0.5
        return jax.random.uniform(k, shape, jnp.float32, -bound, bound)

    w1 = unif(ks[0], (D_IN, filter_size), D_IN).astype(jnp.bfloat16)
    b1 = unif(ks[1], (1, filter_size), D_IN)
    w2 = unif(ks[2], (filter_size, filter_size), filter_size).astype(jnp.bfloat16)
    b2 = unif(ks[3], (1, filter_size), filter_size)
    w3 = unif(ks[4], (D_OUT, filter_size), filter_size).astype(jnp.bfloat16)
    b3 = unif(ks[5], (D_OUT, 1), filter_size)
    return {"w1": w1, "b1": b1, "w2": w2, "b2": b2, "w3": w3, "b3": b3}


def reference_forward(x, p):
    """Pure-JAX reference with identical bf16-operand / f32-accumulate math."""
    h = jnp.dot(x.astype(jnp.bfloat16), p["w1"],
                preferred_element_type=jnp.float32)
    h = jnp.maximum(h + p["b1"], 0.0)
    h = jnp.dot(h.astype(jnp.bfloat16), p["w2"],
                preferred_element_type=jnp.float32)
    h = jnp.maximum(h + p["b2"], 0.0)
    return (jnp.dot(h.astype(jnp.bfloat16), p["w3"].T,
                    preferred_element_type=jnp.float32) + p["b3"].T)


if __name__ == "__main__":
    key = jax.random.PRNGKey(0)
    k_x, k_p = jax.random.split(key)

    # Deliberately not a multiple of 128: exercises the ragged last block and
    # gives a 2-step parallel grid (both TensorCores busy on v7x).
    N = 1000
    x = jax.random.normal(k_x, (N, D_IN), dtype=jnp.float32)
    params = init_params(k_p)

    out = very_tiny_nerf_forward(x, params)
    out = jax.block_until_ready(out)
    assert out.shape == (N, D_OUT)

    ref = reference_forward(x, params)
    assert jnp.allclose(out, ref, atol=1e-2, rtol=1e-2), "mismatch vs pure-JAX reference"

    # Lane-dense path (skips the wrapper transpose) must agree too.
    out_t = jax.block_until_ready(
        very_tiny_nerf_forward(x, params, lane_dense_output=True))
    assert out_t.shape == (D_OUT, N)
    assert jnp.allclose(out_t.T, ref, atol=1e-2, rtol=1e-2)

    print("KERNEL_OK")
</pallas_src>

<mosaic_0001>
module attributes {stable_mosaic.version = 11 : i64} {
  func.func @_nerf_mlp_kernel(%arg0: i32, %arg1: memref<512x39xf32, #tpu.memory_space<vmem>>, %arg2: memref<39x128xbf16, #tpu.memory_space<vmem>>, %arg3: memref<1x128xf32, #tpu.memory_space<vmem>>, %arg4: memref<128x128xbf16, #tpu.memory_space<vmem>>, %arg5: memref<1x128xf32, #tpu.memory_space<vmem>>, %arg6: memref<4x128xbf16, #tpu.memory_space<vmem>>, %arg7: memref<4x1xf32, #tpu.memory_space<vmem>>, %arg8: memref<4x512xf32, #tpu.memory_space<vmem>>) attributes {dimension_semantics = [#tpu.dimension_semantics<parallel>], iteration_bounds = array<i64: 2>, scalar_prefetch = 0 : i64, scratch_operands = 0 : i64, tpu.core_type = #tpu.core_type<tc>, window_params = [{transform_indices = @transform_0, window_bounds = array<i64: 512, 39>}, {pipeline_mode = #tpu.pipeline_mode<synchronous>, transform_indices = @transform_1, window_bounds = array<i64: 39, 128>}, {pipeline_mode = #tpu.pipeline_mode<synchronous>, transform_indices = @transform_2, window_bounds = array<i64: 1, 128>}, {pipeline_mode = #tpu.pipeline_mode<synchronous>, transform_indices = @transform_3, window_bounds = array<i64: 128, 128>}, {pipeline_mode = #tpu.pipeline_mode<synchronous>, transform_indices = @transform_4, window_bounds = array<i64: 1, 128>}, {pipeline_mode = #tpu.pipeline_mode<synchronous>, transform_indices = @transform_5, window_bounds = array<i64: 4, 128>}, {pipeline_mode = #tpu.pipeline_mode<synchronous>, transform_indices = @transform_6, window_bounds = array<i64: 4, 1>}, {transform_indices = @transform_7, window_bounds = array<i64: 4, 512>}]} {
    %c0 = arith.constant 0 : index
    %c0_0 = arith.constant 0 : index
    %0 = vector.load %arg1[%c0, %c0_0] : memref<512x39xf32, #tpu.memory_space<vmem>>, vector<512x39xf32>
    %1 = arith.truncf %0 : vector<512x39xf32> to vector<512x39xbf16>
    %c0_1 = arith.constant 0 : index
    %c0_2 = arith.constant 0 : index
    %2 = vector.load %arg2[%c0_1, %c0_2] : memref<39x128xbf16, #tpu.memory_space<vmem>>, vector<39x128xbf16>
    %cst = arith.constant dense<0.000000e+00> : vector<512x128xf32>
    %3 = tpu.matmul %1, %2, %cst {dimension_numbers = #tpu.dot_dimension_numbers<[1], [0], [0], [1], [0, 0, 1, 1], [], []>} : vector<512x39xbf16>, vector<39x128xbf16>, vector<512x128xf32> -> vector<512x128xf32>
    %c0_3 = arith.constant 0 : index
    %c0_4 = arith.constant 0 : index
    %4 = vector.load %arg3[%c0_3, %c0_4] : memref<1x128xf32, #tpu.memory_space<vmem>>, vector<1x128xf32>
    %5 = vector.broadcast %4 : vector<1x128xf32> to vector<512x128xf32>
    %6 = arith.addf %3, %5 : vector<512x128xf32>
    %cst_5 = arith.constant 0.000000e+00 : f32
    %7 = vector.broadcast %cst_5 : f32 to vector<512x128xf32>
    %8 = arith.maximumf %6, %7 : vector<512x128xf32>
    %9 = arith.truncf %8 : vector<512x128xf32> to vector<512x128xbf16>
    %c0_6 = arith.constant 0 : index
    %c0_7 = arith.constant 0 : index
    %10 = vector.load %arg4[%c0_6, %c0_7] : memref<128x128xbf16, #tpu.memory_space<vmem>>, vector<128x128xbf16>
    %cst_8 = arith.constant dense<0.000000e+00> : vector<512x128xf32>
    %11 = tpu.matmul %9, %10, %cst_8 {dimension_numbers = #tpu.dot_dimension_numbers<[1], [0], [0], [1], [0, 0, 1, 1], [], []>} : vector<512x128xbf16>, vector<128x128xbf16>, vector<512x128xf32> -> vector<512x128xf32>
    %c0_9 = arith.constant 0 : index
    %c0_10 = arith.constant 0 : index
    %12 = vector.load %arg5[%c0_9, %c0_10] : memref<1x128xf32, #tpu.memory_space<vmem>>, vector<1x128xf32>
    %13 = vector.broadcast %12 : vector<1x128xf32> to vector<512x128xf32>
    %14 = arith.addf %11, %13 : vector<512x128xf32>
    %cst_11 = arith.constant 0.000000e+00 : f32
    %15 = vector.broadcast %cst_11 : f32 to vector<512x128xf32>
    %16 = arith.maximumf %14, %15 : vector<512x128xf32>
    %c0_12 = arith.constant 0 : index
    %c0_13 = arith.constant 0 : index
    %17 = vector.load %arg6[%c0_12, %c0_13] : memref<4x128xbf16, #tpu.memory_space<vmem>>, vector<4x128xbf16>
    %18 = arith.truncf %16 : vector<512x128xf32> to vector<512x128xbf16>
    %cst_14 = arith.constant dense<0.000000e+00> : vector<4x512xf32>
    %19 = tpu.matmul %17, %18, %cst_14 {dimension_numbers = #tpu.dot_dimension_numbers<[1], [1], [0], [0], [0, 0, 1, 0], [], []>} : vector<4x128xbf16>, vector<512x128xbf16>, vector<4x512xf32> -> vector<4x512xf32>
    %c0_15 = arith.constant 0 : index
    %c0_16 = arith.constant 0 : index
    %20 = vector.load %arg7[%c0_15, %c0_16] : memref<4x1xf32, #tpu.memory_space<vmem>>, vector<4x1xf32>
    %21 = vector.broadcast %20 : vector<4x1xf32> to vector<4x512xf32>
    %22 = arith.addf %19, %21 : vector<4x512xf32>
    %c0_17 = arith.constant 0 : index
    %c0_18 = arith.constant 0 : index
    %23 = vector.load %arg8[%c0_17, %c0_18] : memref<4x512xf32, #tpu.memory_space<vmem>>, vector<4x512xf32>
    tpu.vector_store %arg8[%c0_17, %c0_18], %22 {strides = array<i32>} : memref<4x512xf32, #tpu.memory_space<vmem>>, vector<4x512xf32>,
    return
  }
  func.func @transform_0(%arg0: i32) -> (i32, i32) {
    %c0_i32 = arith.constant 0 : i32
    %c0_i32_0 = arith.constant 0 : i32
    return %arg0, %c0_i32 : i32, i32
  }
  func.func @transform_1(%arg0: i32) -> (i32, i32) {
    %c0_i32 = arith.constant 0 : i32
    %c0_i32_0 = arith.constant 0 : i32
    %c0_i32_1 = arith.constant 0 : i32
    return %c0_i32, %c0_i32_0 : i32, i32
  }
  func.func @transform_2(%arg0: i32) -> (i32, i32) {
    %c0_i32 = arith.constant 0 : i32
    %c0_i32_0 = arith.constant 0 : i32
    %c0_i32_1 = arith.constant 0 : i32
    return %c0_i32, %c0_i32_0 : i32, i32
  }
  func.func @transform_3(%arg0: i32) -> (i32, i32) {
    %c0_i32 = arith.constant 0 : i32
    %c0_i32_0 = arith.constant 0 : i32
    %c0_i32_1 = arith.constant 0 : i32
    return %c0_i32, %c0_i32_0 : i32, i32
  }
  func.func @transform_4(%arg0: i32) -> (i32, i32) {
    %c0_i32 = arith.constant 0 : i32
    %c0_i32_0 = arith.constant 0 : i32
    %c0_i32_1 = arith.constant 0 : i32
    return %c0_i32, %c0_i32_0 : i32, i32
  }
  func.func @transform_5(%arg0: i32) -> (i32, i32) {
    %c0_i32 = arith.constant 0 : i32
    %c0_i32_0 = arith.constant 0 : i32
    %c0_i32_1 = arith.constant 0 : i32
    return %c0_i32, %c0_i32_0 : i32, i32
  }
  func.func @transform_6(%arg0: i32) -> (i32, i32) {
    %c0_i32 = arith.constant 0 : i32
    %c0_i32_0 = arith.constant 0 : i32
    %c0_i32_1 = arith.constant 0 : i32
    return %c0_i32, %c0_i32_0 : i32, i32
  }
  func.func @transform_7(%arg0: i32) -> (i32, i32) {
    %c0_i32 = arith.constant 0 : i32
    %c0_i32_0 = arith.constant 0 : i32
    return %c0_i32, %arg0 : i32, i32
  }
}

</mosaic_0001>

<llo_original>
// kernel: very_tiny_nerf_forward.1
$region0: #{very_tiny_nerf_forward.1}
  #allocation0 [shape = 'u32[]', space=smem, size = 0x4, offset = 0x4, fixed_abs, tag = 'smem constant byte address 0x4 - core index']
  #allocation1 [shape = 'u32[72,128]{1,0:T(1,128)}', space=vmem, size = 0x9000, scoped, tag = 'internal scratch']
  %s0 = inlined_call_operand.vmem [shape: f32[1000,39], index: 0, kind: input, shape index: {}]
  %s1 = inlined_call_operand.vmem [shape: bf16[39,128], index: 1, kind: input, shape index: {}]
  %s2 = inlined_call_operand.vmem [shape: f32[1,128], index: 2, kind: input, shape index: {}]
  %s3 = inlined_call_operand.vmem [shape: bf16[128,128], index: 3, kind: input, shape index: {}]
  %s4 = inlined_call_operand.vmem [shape: f32[1,128], index: 4, kind: input, shape index: {}]
  %s5 = inlined_call_operand.vmem [shape: bf16[4,128], index: 5, kind: input, shape index: {}]
  %s6 = inlined_call_operand.vmem [shape: f32[4,1], index: 6, kind: input, shape index: {}]
  %s7 = inlined_call_operand.hbm [shape: f32[4,1000], index: 7, kind: output, shape index: {}]
  %s8 = sld [smem:[#allocation0]]
  $region61: #{very_tiny_nerf_forward.1} parent=0
    _
  %s10 = ssub.s32 1, %s8
  %s11 = scalar_select 0, %s10, %s8
  $region1: #{very_tiny_nerf_forward.1} parent=0
    #allocation2 [shape = 'u8[16384]{0}', space=vmem, size = 0x4000, scoped, tag = 'output window, operand 0']
    #allocation3 [shape = 's32[2]{0}', space=sflag, size = 0x8, scoped, tag = 'scoped memory for very_tiny_nerf_forward.1']
    %12 = vsyncpa [#allocation3], 0
    %s13 = scalar_lea.sflag [#allocation3], 1
    %14 = vsyncpa %s13, 0
    loop: start=0, step=1, limit=4
    $region2: #{very_tiny_nerf_forward.1} parent=1 // loop_pre_header
      _
    $region3: #{very_tiny_nerf_forward.1} parent=1 // loop_header
      %s16 = sphi 0, %s20
      %p17 = scmp.ge.s32.totalorder %s16, 4
      %s26 = sphi 0, %s28
      %s29 = sphi 0, %s26
      %s30 = sphi 0, %s29
      %s46 = sphi 0, %s30
      %s50 = sphi 0, %s50
      %s52 = sphi 0, %s50
      %s53 = sphi 0, %s52
      %s67 = sphi 0, %s53
      %s71 = sphi 0, %s71
      %s73 = sphi 0, %s71
      %s74 = sphi 0, %s73
      %s88 = sphi 0, %s74
      %s92 = sphi 0, %s92
      %s94 = sphi 0, %s92
      %s95 = sphi 0, %s94
      %s109 = sphi 0, %s95
      %s113 = sphi 0, %s113
      %s115 = sphi 0, %s113
      %s116 = sphi 0, %s115
      %s130 = sphi 0, %s116
      %s134 = sphi 0, %s134
      %s136 = sphi 0, %s134
      %s137 = sphi 0, %s136
      %s151 = sphi 0, %s137
      %s155 = sphi 0, %s155
      %s157 = sphi 0, %s155
      %s158 = sphi 0, %s157
      %s172 = sphi 0, %s158
      %s178 = sphi 0, %s180
      %s181 = sphi 0, %s178
      %s182 = sphi 0, %s181
      %s198 = sphi 0, %s182
    $region4: #{very_tiny_nerf_forward.1} parent=1 // loop_header_branch
      %19 = sbr.rel (%p17) target = $region8
    $region5: #{very_tiny_nerf_forward.1} parent=1 // loop_body
      %s21 = ssub.s32 %s16, 1
      %s22 = ssub.s32 %s16, 2
      %s23 = sadd.s32 %s16, 1
      %s24 = ssub.s32 %s16, %s23
      %p25 = scmp.eq.s32.totalorder %s24, 0
      %s27 = sadd.s32 %s26, 1
      %s28 = scalar_select %p25, %s26, %s27
      %p31 = pneg %p25
      %p32 = scmp.eq.s32.totalorder %s16, 1
      %p33 = por %p31, %p32
      %p34 = scmp.ne.s32.totalorder %s26, %s29
      %p35 = scmp.eq.s32.totalorder %s16, 0
      %p36 = por %p34, %p35
      %p37 = scmp.ne.s32.totalorder %s26, %s29
      %p38 = scmp.eq.s32.totalorder %s21, 1
      %p39 = por %p37, %p38
      %p40 = scmp.ne.s32.totalorder %s29, %s30
      %p41 = scmp.eq.s32.totalorder %s21, 0
      %p42 = por %p40, %p41
      %p43 = scmp.ne.s32.totalorder %s29, %s30
      %p44 = scmp.eq.s32.totalorder %s22, 1
      %p45 = por %p43, %p44
      %p47 = scmp.ne.s32.totalorder %s30, %s46
      %p48 = scmp.eq.s32.totalorder %s22, 0
      %p49 = por %p47, %p48
      %s51 = sadd.s32 %s50, 1
      %p54 = scmp.eq.s32.totalorder %s16, 1
      %p55 = scmp.ne.s32.totalorder %s50, %s52
      %p56 = scmp.eq.s32.totalorder %s16, 0
      %p57 = por %p55, %p56
      %p58 = scmp.ne.s32.totalorder %s50, %s52
      %p59 = scmp.eq.s32.totalorder %s21, 1
      %p60 = por %p58, %p59
      %p61 = scmp.ne.s32.totalorder %s52, %s53
      %p62 = scmp.eq.s32.totalorder %s21, 0
      %p63 = por %p61, %p62
      %p64 = scmp.ne.s32.totalorder %s52, %s53
      %p65 = scmp.eq.s32.totalorder %s22, 1
      %p66 = por %p64, %p65
      %p68 = scmp.ne.s32.totalorder %s53, %s67
      %p69 = scmp.eq.s32.totalorder %s22, 0
      %p70 = por %p68, %p69
      %s72 = sadd.s32 %s71, 1
      %p75 = scmp.eq.s32.totalorder %s16, 1
      %p76 = scmp.ne.s32.totalorder %s71, %s73
      %p77 = scmp.eq.s32.totalorder %s16, 0
      %p78 = por %p76, %p77
      %p79 = scmp.ne.s32.totalorder %s71, %s73
      %p80 = scmp.eq.s32.totalorder %s21, 1
      %p81 = por %p79, %p80
      %p82 = scmp.ne.s32.totalorder %s73, %s74
      %p83 = scmp.eq.s32.totalorder %s21, 0
      %p84 = por %p82, %p83
      %p85 = scmp.ne.s32.totalorder %s73, %s74
      %p86 = scmp.eq.s32.totalorder %s22, 1
      %p87 = por %p85, %p86
      %p89 = scmp.ne.s32.totalorder %s74, %s88
      %p90 = scmp.eq.s32.totalorder %s22, 0
      %p91 = por %p89, %p90
      %s93 = sadd.s32 %s92, 1
      %p96 = scmp.eq.s32.totalorder %s16, 1
      %p97 = scmp.ne.s32.totalorder %s92, %s94
      %p98 = scmp.eq.s32.totalorder %s16, 0
      %p99 = por %p97, %p98
      %p100 = scmp.ne.s32.totalorder %s92, %s94
      %p101 = scmp.eq.s32.totalorder %s21, 1
      %p102 = por %p100, %p101
      %p103 = scmp.ne.s32.totalorder %s94, %s95
      %p104 = scmp.eq.s32.totalorder %s21, 0
      %p105 = por %p103, %p104
      %p106 = scmp.ne.s32.totalorder %s94, %s95
      %p107 = scmp.eq.s32.totalorder %s22, 1
      %p108 = por %p106, %p107
      %p110 = scmp.ne.s32.totalorder %s95, %s109
      %p111 = scmp.eq.s32.totalorder %s22, 0
      %p112 = por %p110, %p111
      %s114 = sadd.s32 %s113, 1
      %p117 = scmp.eq.s32.totalorder %s16, 1
      %p118 = scmp.ne.s32.totalorder %s113, %s115
      %p119 = scmp.eq.s32.totalorder %s16, 0
      %p120 = por %p118, %p119
      %p121 = scmp.ne.s32.totalorder %s113, %s115
      %p122 = scmp.eq.s32.totalorder %s21, 1
      %p123 = por %p121, %p122
      %p124 = scmp.ne.s32.totalorder %s115, %s116
      %p125 = scmp.eq.s32.totalorder %s21, 0
      %p126 = por %p124, %p125
      %p127 = scmp.ne.s32.totalorder %s115, %s116
      %p128 = scmp.eq.s32.totalorder %s22, 1
      %p129 = por %p127, %p128
      %p131 = scmp.ne.s32.totalorder %s116, %s130
      %p132 = scmp.eq.s32.totalorder %s22, 0
      %p133 = por %p131, %p132
      %s135 = sadd.s32 %s134, 1
      %p138 = scmp.eq.s32.totalorder %s16, 1
      %p139 = scmp.ne.s32.totalorder %s134, %s136
      %p140 = scmp.eq.s32.totalorder %s16, 0
      %p141 = por %p139, %p140
      %p142 = scmp.ne.s32.totalorder %s134, %s136
      %p143 = scmp.eq.s32.totalorder %s21, 1
      %p144 = por %p142, %p143
      %p145 = scmp.ne.s32.totalorder %s136, %s137
      %p146 = scmp.eq.s32.totalorder %s21, 0
      %p147 = por %p145, %p146
      %p148 = scmp.ne.s32.totalorder %s136, %s137
      %p149 = scmp.eq.s32.totalorder %s22, 1
      %p150 = por %p148, %p149
      %p152 = scmp.ne.s32.totalorder %s137, %s151
      %p153 = scmp.eq.s32.totalorder %s22, 0
      %p154 = por %p152, %p153
      %s156 = sadd.s32 %s155, 1
      %p159 = scmp.eq.s32.totalorder %s16, 1
      %p160 = scmp.ne.s32.totalorder %s155, %s157
      %p161 = scmp.eq.s32.totalorder %s16, 0
      %p162 = por %p160, %p161
      %p163 = scmp.ne.s32.totalorder %s155, %s157
      %p164 = scmp.eq.s32.totalorder %s21, 1
      %p165 = por %p163, %p164
      %p166 = scmp.ne.s32.totalorder %s157, %s158
      %p167 = scmp.eq.s32.totalorder %s21, 0
      %p168 = por %p166, %p167
      %p169 = scmp.ne.s32.totalorder %s157, %s158
      %p170 = scmp.eq.s32.totalorder %s22, 1
      %p171 = por %p169, %p170
      %p173 = scmp.ne.s32.totalorder %s158, %s172
      %p174 = scmp.eq.s32.totalorder %s22, 0
      %p175 = por %p173, %p174
      %s176 = ssub.s32 %s16, %s23
      %p177 = scmp.eq.s32.totalorder %s176, 0
      %s179 = sadd.s32 %s178, 1
      %s180 = scalar_select %p177, %s178, %s179
      %p183 = pneg %p177
      %p184 = scmp.eq.s32.totalorder %s16, 1
      %p185 = por %p183, %p184
      %p186 = scmp.ne.s32.totalorder %s178, %s181
      %p187 = scmp.eq.s32.totalorder %s16, 0
      %p188 = por %p186, %p187
      %p189 = scmp.ne.s32.totalorder %s178, %s181
      %p190 = scmp.eq.s32.totalorder %s21, 1
      %p191 = por %p189, %p190
      %p192 = scmp.ne.s32.totalorder %s181, %s182
      %p193 = scmp.eq.s32.totalorder %s21, 0
      %p194 = por %p192, %p193
      %p195 = scmp.ne.s32.totalorder %s181, %s182
      %p196 = scmp.eq.s32.totalorder %s22, 1
      %p197 = por %p195, %p196
      %p199 = scmp.ne.s32.totalorder %s182, %s198
      %p200 = scmp.eq.s32.totalorder %s22, 0
      %p201 = por %p199, %p200
      %p202 = scmp.le.s32.totalorder 1, %s16
      %p203 = scmp.lt.s32.totalorder %s16, 3
      %p204 = pnand %p202, %p203
      %p205 = pneg %p204
      // Predicated region
      $region9: #{very_tiny_nerf_forward.1} parent=5 // pred_check
        _
      $region10: #{very_tiny_nerf_forward.1} parent=5 // pred_check_branch
        %207 = sbr.rel (%p204) target = $region12
      $region11: #{very_tiny_nerf_forward.1} parent=5 // pred_region
        %s208 = ssub.s32 %s16, 1
        // Predicated region
        $region13: #{very_tiny_nerf_forward.1} parent=11 // pred_check
          %p209 = pneg %p63
        $region14: #{very_tiny_nerf_forward.1} parent=11 // pred_check_branch
          %211 = sbr.rel (%p209) target = $region16
        $region15: #{very_tiny_nerf_forward.1} parent=11 // pred_region
          _
        $region16: #{very_tiny_nerf_forward.1} parent=11 // pred_fallthru
          _
        // Predicated region
        $region17: #{very_tiny_nerf_forward.1} parent=11 // pred_check
          %p212 = pneg %p84
        $region18: #{very_tiny_nerf_forward.1} parent=11 // pred_check_branch
          %214 = sbr.rel (%p212) target = $region20
        $region19: #{very_tiny_nerf_forward.1} parent=11 // pred_region
          _
        $region20: #{very_tiny_nerf_forward.1} parent=11 // pred_fallthru
          _
        // Predicated region
        $region21: #{very_tiny_nerf_forward.1} parent=11 // pred_check
          %p215 = pneg %p105
        $region22: #{very_tiny_nerf_forward.1} parent=11 // pred_check_branch
          %217 = sbr.rel (%p215) target = $region24
        $region23: #{very_tiny_nerf_forward.1} parent=11 // pred_region
          _
        $region24: #{very_tiny_nerf_forward.1} parent=11 // pred_fallthru
          _
        // Predicated region
        $region25: #{very_tiny_nerf_forward.1} parent=11 // pred_check
          %p218 = pneg %p126
        $region26: #{very_tiny_nerf_forward.1} parent=11 // pred_check_branch
          %220 = sbr.rel (%p218) target = $region28
        $region27: #{very_tiny_nerf_forward.1} parent=11 // pred_region
          _
        $region28: #{very_tiny_nerf_forward.1} parent=11 // pred_fallthru
          _
        // Predicated region
        $region29: #{very_tiny_nerf_forward.1} parent=11 // pred_check
          %p221 = pneg %p147
        $region30: #{very_tiny_nerf_forward.1} parent=11 // pred_check_branch
          %223 = sbr.rel (%p221) target = $region32
        $region31: #{very_tiny_nerf_forward.1} parent=11 // pred_region
          _
        $region32: #{very_tiny_nerf_forward.1} parent=11 // pred_fallthru
          _
        // Predicated region
        $region33: #{very_tiny_nerf_forward.1} parent=11 // pred_check
          %p224 = pneg %p168
        $region34: #{very_tiny_nerf_forward.1} parent=11 // pred_check_branch
          %226 = sbr.rel (%p224) target = $region36
        $region35: #{very_tiny_nerf_forward.1} parent=11 // pred_region
          _
        $region36: #{very_tiny_nerf_forward.1} parent=11 // pred_fallthru
          _
      $region12: #{very_tiny_nerf_forward.1} parent=5 // pred_fallthru
        _
      %p227 = scmp.lt.s32.totalorder %s16, 2
      // Predicated region
      $region37: #{very_tiny_nerf_forward.1} parent=5 // pred_check
        %p228 = pneg %p227
      $region38: #{very_tiny_nerf_forward.1} parent=5 // pred_check_branch
        %230 = sbr.rel (%p228) target = $region40
      $region39: #{very_tiny_nerf_forward.1} parent=5 // pred_region
        // Predicated region
        $region41: #{very_tiny_nerf_forward.1} parent=39 // pred_check
          %p231 = pneg %p36
        $region42: #{very_tiny_nerf_forward.1} parent=39 // pred_check_branch
          %233 = sbr.rel (%p231) target = $region44
        $region43: #{very_tiny_nerf_forward.1} parent=39 // pred_region
          %s234 = smul.u32 64, %s16
          %s235 = ssub.s32 125, %s234
          %p236 = scmp.lt.s32.totalorder %s235, 64
          %s237 = scalar_select %p236, %s235, 64
          %s238 = smul.u32 8, %s237
          %p239 = scmp.lt.s32.totalorder %s234, 124
          %s240 = scalar_select %p239, %s234, 124
          %s241 = smul.addr %s240, 8
          %s242 = scalar_lea.vmem %s0, %s241
          %s243 = smul.u32 64, %s16
          %s244 = ssub.s32 125, %s243
          %p245 = scmp.lt.s32.totalorder %s244, 64
          %s246 = scalar_select %p245, %s244, 64
          %s247 = smul.u32 8, %s246
        $region44: #{very_tiny_nerf_forward.1} parent=39 // pred_fallthru
          _
      $region40: #{very_tiny_nerf_forward.1} parent=5 // pred_fallthru
        _
      %p248 = scmp.le.s32.totalorder 1, %s16
      %p249 = scmp.lt.s32.totalorder %s16, 3
      %p250 = pnand %p248, %p249
      %p251 = pneg %p250
      // Predicated region
      $region45: #{very_tiny_nerf_forward.1} parent=5 // pred_check
        _
      $region46: #{very_tiny_nerf_forward.1} parent=5 // pred_check_branch
        %253 = sbr.rel (%p250) target = $region48
      $region47: #{very_tiny_nerf_forward.1} parent=5 // pred_region
        %s254 = ssub.s32 %s16, 1
        %s255 = smul.u32 64, %s21
        %s256 = ssub.s32 125, %s255
        %p257 = scmp.lt.s32.totalorder %s256, 64
        %s258 = scalar_select %p257, %s256, 64
        %s259 = smul.u32 8, %s258
        %p260 = scmp.lt.s32.totalorder %s255, 124
        %s261 = scalar_select %p260, %s255, 124
        %s262 = smul.addr %s261, 8
        %s263 = scalar_lea.vmem %s0, %s262
        %p264 = pneg %p42
        %p265 = pneg %p39
        %p266 = pneg %p63
        %p267 = pneg %p60
        %p268 = pneg %p84
        %p269 = pneg %p81
        %p270 = pneg %p105
        %p271 = pneg %p102
        %p272 = pneg %p126
        %p273 = pneg %p123
        %p274 = pneg %p147
        %p275 = pneg %p144
        %p276 = pneg %p168
        %p277 = pneg %p165
        %p278 = pneg %p194
        %p279 = pneg %p191
        %s280 = sand.u32 %s181, 1
        %s281 = scalar_lea.sflag [#allocation3], %s280
        %s282 = sand.u32 %s181, 1
        %s283 = smul.addr %s282, 16
        %s284 = scalar_lea.vmem [#allocation2], %s283
        %s285 = smul.u32 64, %s21
        %s286 = ssub.s32 125, %s285
        %p287 = scmp.lt.s32.totalorder %s286, 64
        %s288 = scalar_select %p287, %s286, 64
        %s289 = smul.u32 8, %s288
        %p290 = scmp.lt.s32.totalorder %s285, 124
        %s291 = scalar_select %p290, %s285, 124
        %s292 = smul.addr %s291, 8
        %s293 = scalar_lea.vmem %s0, %s292
        %s294 = smul.u32 64, %s21
        %s295 = ssub.s32 125, %s294
        %p296 = scmp.lt.s32.totalorder %s295, 64
        %s297 = scalar_select %p296, %s295, 64
        %s298 = smul.u32 8, %s297
        %s299 = smul.u32 4, %s21
        %v301 = vld [vmem:[%s293] sm:$0xff]
        %v302 = vld [vmem:[%s293 + $0x8] sm:$0xff]
        %v303 = vld [vmem:[%s293 + $0x10] sm:$0xff]
        %v304 = vld [vmem:[%s293 + $0x18] sm:$0xff]
        %v305 = vld [vmem:[%s293 + $0x20] sm:$0xff]
        %v306 = vld [vmem:[%s293 + $0x28] sm:$0xff]
        %v307 = vld [vmem:[%s293 + $0x30] sm:$0xff]
        %v308 = vld [vmem:[%s293 + $0x38] sm:$0xff]
        %v309 = vld [vmem:[%s293 + $0x40] sm:$0xff]
        %v310 = vld [vmem:[%s293 + $0x48] sm:$0xff]
        %v311 = vld [vmem:[%s293 + $0x50] sm:$0xff]
        %v312 = vld [vmem:[%s293 + $0x58] sm:$0xff]
        %v313 = vld [vmem:[%s293 + $0x60] sm:$0xff]
        %v314 = vld [vmem:[%s293 + $0x68] sm:$0xff]
        %v315 = vld [vmem:[%s293 + $0x70] sm:$0xff]
        %v316 = vld [vmem:[%s293 + $0x78] sm:$0xff]
        %v317 = vld [vmem:[%s293 + $0x80] sm:$0xff]
        %v318 = vld [vmem:[%s293 + $0x88] sm:$0xff]
        %v319 = vld [vmem:[%s293 + $0x90] sm:$0xff]
        %v320 = vld [vmem:[%s293 + $0x98] sm:$0xff]
        %v321 = vld [vmem:[%s293 + $0xa0] sm:$0xff]
        %v322 = vld [vmem:[%s293 + $0xa8] sm:$0xff]
        %v323 = vld [vmem:[%s293 + $0xb0] sm:$0xff]
        %v324 = vld [vmem:[%s293 + $0xb8] sm:$0xff]
        %v325 = vld [vmem:[%s293 + $0xc0] sm:$0xff]
        %v326 = vld [vmem:[%s293 + $0xc8] sm:$0xff]
        %v327 = vld [vmem:[%s293 + $0xd0] sm:$0xff]
        %v328 = vld [vmem:[%s293 + $0xd8] sm:$0xff]
        %v329 = vld [vmem:[%s293 + $0xe0] sm:$0xff]
        %v330 = vld [vmem:[%s293 + $0xe8] sm:$0xff]
        %v331 = vld [vmem:[%s293 + $0xf0] sm:$0xff]
        %v332 = vld [vmem:[%s293 + $0xf8] sm:$0xff]
        %v333 = vld [vmem:[%s293 + $0x100] sm:$0xff]
        %v334 = vld [vmem:[%s293 + $0x108] sm:$0xff]
        %v335 = vld [vmem:[%s293 + $0x110] sm:$0xff]
        %v336 = vld [vmem:[%s293 + $0x118] sm:$0xff]
        %v337 = vld [vmem:[%s293 + $0x120] sm:$0xff]
        %v338 = vld [vmem:[%s293 + $0x128] sm:$0xff]
        %v339 = vld [vmem:[%s293 + $0x130] sm:$0xff]
        %v340 = vld [vmem:[%s293 + $0x138] sm:$0xff]
        %v341 = vld [vmem:[%s293 + $0x140] sm:$0xff]
        %v342 = vld [vmem:[%s293 + $0x148] sm:$0xff]
        %v343 = vld [vmem:[%s293 + $0x150] sm:$0xff]
        %v344 = vld [vmem:[%s293 + $0x158] sm:$0xff]
        %v345 = vld [vmem:[%s293 + $0x160] sm:$0xff]
        %v346 = vld [vmem:[%s293 + $0x168] sm:$0xff]
        %v347 = vld [vmem:[%s293 + $0x170] sm:$0xff]
        %v348 = vld [vmem:[%s293 + $0x178] sm:$0xff]
        %v349 = vld [vmem:[%s293 + $0x180] sm:$0xff]
        %v350 = vld [vmem:[%s293 + $0x188] sm:$0xff]
        %v351 = vld [vmem:[%s293 + $0x190] sm:$0xff]
        %v352 = vld [vmem:[%s293 + $0x198] sm:$0xff]
        %v353 = vld [vmem:[%s293 + $0x1a0] sm:$0xff]
        %v354 = vld [vmem:[%s293 + $0x1a8] sm:$0xff]
        %v355 = vld [vmem:[%s293 + $0x1b0] sm:$0xff]
        %v356 = vld [vmem:[%s293 + $0x1b8] sm:$0xff]
        %v357 = vld [vmem:[%s293 + $0x1c0] sm:$0xff]
        %v358 = vld [vmem:[%s293 + $0x1c8] sm:$0xff]
        %v359 = vld [vmem:[%s293 + $0x1d0] sm:$0xff]
        %v360 = vld [vmem:[%s293 + $0x1d8] sm:$0xff]
        %v361 = vld [vmem:[%s293 + $0x1e0] sm:$0xff]
        %v362 = vld [vmem:[%s293 + $0x1e8] sm:$0xff]
        %v363 = vld [vmem:[%s293 + $0x1f0] sm:$0xff]
        %v364 = vld [vmem:[%s293 + $0x1f8] sm:$0xff]
        %v365 = vpack.c.bf16 %v302, %v301
        %v366 = vpack.c.bf16 %v304, %v303
        %v367 = vpack.c.bf16 %v306, %v305
        %v368 = vpack.c.bf16 %v308, %v307
        %v369 = vpack.c.bf16 %v310, %v309
        %v370 = vpack.c.bf16 %v312, %v311
        %v371 = vpack.c.bf16 %v314, %v313
        %v372 = vpack.c.bf16 %v316, %v315
        %v373 = vpack.c.bf16 %v318, %v317
        %v374 = vpack.c.bf16 %v320, %v319
        %v375 = vpack.c.bf16 %v322, %v321
        %v376 = vpack.c.bf16 %v324, %v323
        %v377 = vpack.c.bf16 %v326, %v325
        %v378 = vpack.c.bf16 %v328, %v327
        %v379 = vpack.c.bf16 %v330, %v329
        %v380 = vpack.c.bf16 %v332, %v331
        %v381 = vpack.c.bf16 %v334, %v333
        %v382 = vpack.c.bf16 %v336, %v335
        %v383 = vpack.c.bf16 %v338, %v337
        %v384 = vpack.c.bf16 %v340, %v339
        %v385 = vpack.c.bf16 %v342, %v341
        %v386 = vpack.c.bf16 %v344, %v343
        %v387 = vpack.c.bf16 %v346, %v345
        %v388 = vpack.c.bf16 %v348, %v347
        %v389 = vpack.c.bf16 %v350, %v349
        %v390 = vpack.c.bf16 %v352, %v351
        %v391 = vpack.c.bf16 %v354, %v353
        %v392 = vpack.c.bf16 %v356, %v355
        %v393 = vpack.c.bf16 %v358, %v357
        %v394 = vpack.c.bf16 %v360, %v359
        %v395 = vpack.c.bf16 %v362, %v361
        %v396 = vpack.c.bf16 %v364, %v363
        %v397 = vld [vmem:[%s1] sm:$0xf]
        %v398 = vld [vmem:[%s1 + $0x4] sm:$0xf]
        %v399 = vld [vmem:[%s1 + $0x8] sm:$0xf]
        %v400 = vld [vmem:[%s1 + $0xc] sm:$0xf]
        %v401 = vld [vmem:[%s1 + $0x10] sm:$0xf]
        %v402 = vld [vmem:[%s2] sm:$0x1]
        %v404 = vperm.slane %v402, 0
        %v411 = vunpack.c.l.b16 %v397
        %v412 = vunpack.c.l.b16 %v398
        %v413 = vunpack.c.l.b16 %v399
        %v414 = vunpack.c.l.b16 %v400
        %v415 = vunpack.c.l.b16 %v401
        %v416 = vpack.c.b16 %v412, %v411
        %v417 = vpack.c.b16 %v414, %v413
        %v418 = vpack.c.b16 %v415, %v415
        %vm421 = vcmask 318464
        %v423 = vsel %vm421, %v365, 0
        %v426 = vsel %vm421, %v366, 0
        %v429 = vsel %vm421, %v367, 0
        %v432 = vsel %vm421, %v368, 0
        %v435 = vsel %vm421, %v369, 0
        %v438 = vsel %vm421, %v370, 0
        %v441 = vsel %vm421, %v371, 0
        %v444 = vsel %vm421, %v372, 0
        %v447 = vsel %vm421, %v373, 0
        %v450 = vsel %vm421, %v374, 0
        %v453 = vsel %vm421, %v375, 0
        %v456 = vsel %vm421, %v376, 0
        %v459 = vsel %vm421, %v377, 0
        %v462 = vsel %vm421, %v378, 0
        %v465 = vsel %vm421, %v379, 0
        %v468 = vsel %vm421, %v380, 0
        %v471 = vsel %vm421, %v381, 0
        %v474 = vsel %vm421, %v382, 0
        %v477 = vsel %vm421, %v383, 0
        %v480 = vsel %vm421, %v384, 0
        %v483 = vsel %vm421, %v385, 0
        %v486 = vsel %vm421, %v386, 0
        %v489 = vsel %vm421, %v387, 0
        %v492 = vsel %vm421, %v388, 0
        %v495 = vsel %vm421, %v389, 0
        %v498 = vsel %vm421, %v390, 0
        %v501 = vsel %vm421, %v391, 0
        %v504 = vsel %vm421, %v392, 0
        %v507 = vsel %vm421, %v393, 0
        %v510 = vsel %vm421, %v394, 0
        %v513 = vsel %vm421, %v395, 0
        %v516 = vsel %vm421, %v396, 0
        %vm518 = vcmask 1042432
        %vm519 = vcmask 1043456
        %v520 = vsel %vm518, 4294967295, 65535
        %v521 = vsel %vm519, %v520, 0
        %v523 = vand.u32 %v418, %v521
        %525 = vmatpush.bf16.msra.mxu0 0
        %526 = vmatpush.bf16.msra.mxu0 0
        %527 = vmatpush.bf16.msra.mxu0 0
        %528 = vmatpush.bf16.msra.mxu0 0
        %529 = vmatpush.bf16.msra.mxu0 0
        %530 = vmatpush.bf16.msra.mxu0 %v523
        %531 = vmatpush.bf16.msra.mxu0 %v417
        %532 = vmatpush.bf16.msra.mxu0 %v416
        %533 = vmatmul.bf16.gmra.mxu0 %v423
        %v534 = vpop.f32.mrf.mxu0
        %v535 = vadd.f32 %v404, %v534
        %v536 = vpop.f32.mrf.mxu0
        %v537 = vadd.f32 %v404, %v536
        %538 = vmatmul.bf16.gmra.mxu0 %v426
        %v539 = vpop.f32.mrf.mxu0
        %v540 = vadd.f32 %v404, %v539
        %v541 = vpop.f32.mrf.mxu0
        %v542 = vadd.f32 %v404, %v541
        %543 = vmatmul.bf16.gmra.mxu0 %v429
        %v544 = vpop.f32.mrf.mxu0
        %v545 = vadd.f32 %v404, %v544
        %v546 = vpop.f32.mrf.mxu0
        %v547 = vadd.f32 %v404, %v546
        %548 = vmatmul.bf16.gmra.mxu0 %v432
        %v549 = vpop.f32.mrf.mxu0
        %v550 = vadd.f32 %v404, %v549
        %v551 = vpop.f32.mrf.mxu0
        %v552 = vadd.f32 %v404, %v551
        %553 = vmatmul.bf16.gmra.mxu0 %v435
        %v554 = vpop.f32.mrf.mxu0
        %v555 = vadd.f32 %v404, %v554
        %v556 = vpop.f32.mrf.mxu0
        %v557 = vadd.f32 %v404, %v556
        %558 = vmatmul.bf16.gmra.mxu0 %v438
        %v559 = vpop.f32.mrf.mxu0
        %v560 = vadd.f32 %v404, %v559
        %v561 = vpop.f32.mrf.mxu0
        %v562 = vadd.f32 %v404, %v561
        %563 = vmatmul.bf16.gmra.mxu0 %v441
        %v564 = vpop.f32.mrf.mxu0
        %v565 = vadd.f32 %v404, %v564
        %v566 = vpop.f32.mrf.mxu0
        %v567 = vadd.f32 %v404, %v566
        %568 = vmatmul.bf16.gmra.mxu0 %v444
        %v569 = vpop.f32.mrf.mxu0
        %v570 = vadd.f32 %v404, %v569
        %v571 = vpop.f32.mrf.mxu0
        %v572 = vadd.f32 %v404, %v571
        %573 = vmatmul.bf16.gmra.mxu0 %v447
        %v574 = vpop.f32.mrf.mxu0
        %v575 = vadd.f32 %v404, %v574
        %v576 = vpop.f32.mrf.mxu0
        %v577 = vadd.f32 %v404, %v576
        %578 = vmatmul.bf16.gmra.mxu0 %v450
        %v579 = vpop.f32.mrf.mxu0
        %v580 = vadd.f32 %v404, %v579
        %v581 = vpop.f32.mrf.mxu0
        %v582 = vadd.f32 %v404, %v581
        %583 = vmatmul.bf16.gmra.mxu0 %v453
        %v584 = vpop.f32.mrf.mxu0
        %v585 = vadd.f32 %v404, %v584
        %v586 = vpop.f32.mrf.mxu0
        %v587 = vadd.f32 %v404, %v586
        %588 = vmatmul.bf16.gmra.mxu0 %v456
        %v589 = vpop.f32.mrf.mxu0
        %v590 = vadd.f32 %v404, %v589
        %v591 = vpop.f32.mrf.mxu0
        %v592 = vadd.f32 %v404, %v591
        %593 = vmatmul.bf16.gmra.mxu0 %v459
        %v594 = vpop.f32.mrf.mxu0
        %v595 = vadd.f32 %v404, %v594
        %v596 = vpop.f32.mrf.mxu0
        %v597 = vadd.f32 %v404, %v596
        %598 = vmatmul.bf16.gmra.mxu0 %v462
        %v599 = vpop.f32.mrf.mxu0
        %v600 = vadd.f32 %v404, %v599
        %v601 = vpop.f32.mrf.mxu0
        %v602 = vadd.f32 %v404, %v601
        %603 = vmatmul.bf16.gmra.mxu0 %v465
        %v604 = vpop.f32.mrf.mxu0
        %v605 = vadd.f32 %v404, %v604
        %v606 = vpop.f32.mrf.mxu0
        %v607 = vadd.f32 %v404, %v606
        %608 = vmatmul.bf16.gmra.mxu0 %v468
        %v609 = vpop.f32.mrf.mxu0
        %v610 = vadd.f32 %v404, %v609
        %v611 = vpop.f32.mrf.mxu0
        %v612 = vadd.f32 %v404, %v611
        %613 = vmatmul.bf16.gmra.mxu0 %v471
        %v614 = vpop.f32.mrf.mxu0
        %v615 = vadd.f32 %v404, %v614
        %v616 = vpop.f32.mrf.mxu0
        %v617 = vadd.f32 %v404, %v616
        %618 = vmatmul.bf16.gmra.mxu0 %v474
        %v619 = vpop.f32.mrf.mxu0
        %v620 = vadd.f32 %v404, %v619
        %v621 = vpop.f32.mrf.mxu0
        %v622 = vadd.f32 %v404, %v621
        %623 = vmatmul.bf16.gmra.mxu0 %v477
        %v624 = vpop.f32.mrf.mxu0
        %v625 = vadd.f32 %v404, %v624
        %v626 = vpop.f32.mrf.mxu0
        %v627 = vadd.f32 %v404, %v626
        %628 = vmatmul.bf16.gmra.mxu0 %v480
        %v629 = vpop.f32.mrf.mxu0
        %v630 = vadd.f32 %v404, %v629
        %v631 = vpop.f32.mrf.mxu0
        %v632 = vadd.f32 %v404, %v631
        %633 = vmatmul.bf16.gmra.mxu0 %v483
        %v634 = vpop.f32.mrf.mxu0
        %v635 = vadd.f32 %v404, %v634
        %v636 = vpop.f32.mrf.mxu0
        %v637 = vadd.f32 %v404, %v636
        %638 = vmatmul.bf16.gmra.mxu0 %v486
        %v639 = vpop.f32.mrf.mxu0
        %v640 = vadd.f32 %v404, %v639
        %v641 = vpop.f32.mrf.mxu0
        %v642 = vadd.f32 %v404, %v641
        %643 = vmatmul.bf16.gmra.mxu0 %v489
        %v644 = vpop.f32.mrf.mxu0
        %v645 = vadd.f32 %v404, %v644
        %v646 = vpop.f32.mrf.mxu0
        %v647 = vadd.f32 %v404, %v646
        %648 = vmatmul.bf16.gmra.mxu0 %v492
        %v649 = vpop.f32.mrf.mxu0
        %v650 = vadd.f32 %v404, %v649
        %v651 = vpop.f32.mrf.mxu0
        %v652 = vadd.f32 %v404, %v651
        %653 = vmatmul.bf16.gmra.mxu0 %v495
        %v654 = vpop.f32.mrf.mxu0
        %v655 = vadd.f32 %v404, %v654
        %v656 = vpop.f32.mrf.mxu0
        %v657 = vadd.f32 %v404, %v656
        %658 = vmatmul.bf16.gmra.mxu0 %v498
        %v659 = vpop.f32.mrf.mxu0
        %v660 = vadd.f32 %v404, %v659
        %v661 = vpop.f32.mrf.mxu0
        %v662 = vadd.f32 %v404, %v661
        %663 = vmatmul.bf16.gmra.mxu0 %v501
        %v664 = vpop.f32.mrf.mxu0
        %v665 = vadd.f32 %v404, %v664
        %v666 = vpop.f32.mrf.mxu0
        %v667 = vadd.f32 %v404, %v666
        %668 = vmatmul.bf16.gmra.mxu0 %v504
        %v669 = vpop.f32.mrf.mxu0
        %v670 = vadd.f32 %v404, %v669
        %v671 = vpop.f32.mrf.mxu0
        %v672 = vadd.f32 %v404, %v671
        %673 = vmatmul.bf16.gmra.mxu0 %v507
        %v674 = vpop.f32.mrf.mxu0
        %v675 = vadd.f32 %v404, %v674
        %v676 = vpop.f32.mrf.mxu0
        %v677 = vadd.f32 %v404, %v676
        %678 = vmatmul.bf16.gmra.mxu0 %v510
        %v679 = vpop.f32.mrf.mxu0
        %v680 = vadd.f32 %v404, %v679
        %v681 = vpop.f32.mrf.mxu0
        %v682 = vadd.f32 %v404, %v681
        %683 = vmatmul.bf16.gmra.mxu0 %v513
        %v684 = vpop.f32.mrf.mxu0
        %v685 = vadd.f32 %v404, %v684
        %v686 = vpop.f32.mrf.mxu0
        %v687 = vadd.f32 %v404, %v686
        %688 = vmatmul.bf16.gmra.mxu0 %v516
        %v689 = vpop.f32.mrf.mxu0
        %v690 = vadd.f32 %v404, %v689
        %v691 = vpop.f32.mrf.mxu0
        %v692 = vadd.f32 %v404, %v691
        %693 = vdwg.mxu0
        %v694 = vmax.f32 %v535, 0.0
        %v695 = vmax.f32 %v537, 0.0
        %v696 = vmax.f32 %v540, 0.0
        %v697 = vmax.f32 %v542, 0.0
        %v698 = vmax.f32 %v545, 0.0
        %v699 = vmax.f32 %v547, 0.0
        %v700 = vmax.f32 %v550, 0.0
        %v701 = vmax.f32 %v552, 0.0
        %v702 = vmax.f32 %v555, 0.0
        %v703 = vmax.f32 %v557, 0.0
        %v704 = vmax.f32 %v560, 0.0
        %v705 = vmax.f32 %v562, 0.0
        %v706 = vmax.f32 %v565, 0.0
        %v707 = vmax.f32 %v567, 0.0
        %v708 = vmax.f32 %v570, 0.0
        %v709 = vmax.f32 %v572, 0.0
        %v710 = vmax.f32 %v575, 0.0
        %v711 = vmax.f32 %v577, 0.0
        %v712 = vmax.f32 %v580, 0.0
        %v713 = vmax.f32 %v582, 0.0
        %v714 = vmax.f32 %v585, 0.0
        %v715 = vmax.f32 %v587, 0.0
        %v716 = vmax.f32 %v590, 0.0
        %v717 = vmax.f32 %v592, 0.0
        %v718 = vmax.f32 %v595, 0.0
        %v719 = vmax.f32 %v597, 0.0
        %v720 = vmax.f32 %v600, 0.0
        %v721 = vmax.f32 %v602, 0.0
        %v722 = vmax.f32 %v605, 0.0
        %v723 = vmax.f32 %v607, 0.0
        %v724 = vmax.f32 %v610, 0.0
        %v725 = vmax.f32 %v612, 0.0
        %v726 = vmax.f32 %v615, 0.0
        %v727 = vmax.f32 %v617, 0.0
        %v728 = vmax.f32 %v620, 0.0
        %v729 = vmax.f32 %v622, 0.0
        %v730 = vmax.f32 %v625, 0.0
        %v731 = vmax.f32 %v627, 0.0
        %v732 = vmax.f32 %v630, 0.0
        %v733 = vmax.f32 %v632, 0.0
        %v734 = vmax.f32 %v635, 0.0
        %v735 = vmax.f32 %v637, 0.0
        %v736 = vmax.f32 %v640, 0.0
        %v737 = vmax.f32 %v642, 0.0
        %v738 = vmax.f32 %v645, 0.0
        %v739 = vmax.f32 %v647, 0.0
        %v740 = vmax.f32 %v650, 0.0
        %v741 = vmax.f32 %v652, 0.0
        %v742 = vmax.f32 %v655, 0.0
        %v743 = vmax.f32 %v657, 0.0
        %v744 = vmax.f32 %v660, 0.0
        %v745 = vmax.f32 %v662, 0.0
        %v746 = vmax.f32 %v665, 0.0
        %v747 = vmax.f32 %v667, 0.0
        %v748 = vmax.f32 %v670, 0.0
        %v749 = vmax.f32 %v672, 0.0
        %v750 = vmax.f32 %v675, 0.0
        %v751 = vmax.f32 %v677, 0.0
        %v752 = vmax.f32 %v680, 0.0
        %v753 = vmax.f32 %v682, 0.0
        %v754 = vmax.f32 %v685, 0.0
        %v755 = vmax.f32 %v687, 0.0
        %v756 = vmax.f32 %v690, 0.0
        %v757 = vmax.f32 %v692, 0.0
        %v758 = vpack.c.bf16 %v695, %v694
        %v759 = vpack.c.bf16 %v697, %v696
        %v760 = vpack.c.bf16 %v699, %v698
        %v761 = vpack.c.bf16 %v701, %v700
        %v762 = vpack.c.bf16 %v703, %v702
        %v763 = vpack.c.bf16 %v705, %v704
        %v764 = vpack.c.bf16 %v707, %v706
        %v765 = vpack.c.bf16 %v709, %v708
        %v766 = vpack.c.bf16 %v711, %v710
        %v767 = vpack.c.bf16 %v713, %v712
        %v768 = vpack.c.bf16 %v715, %v714
        %v769 = vpack.c.bf16 %v717, %v716
        %v770 = vpack.c.bf16 %v719, %v718
        %v771 = vpack.c.bf16 %v721, %v720
        %v772 = vpack.c.bf16 %v723, %v722
        %v773 = vpack.c.bf16 %v725, %v724
        %v774 = vpack.c.bf16 %v727, %v726
        %v775 = vpack.c.bf16 %v729, %v728
        %v776 = vpack.c.bf16 %v731, %v730
        %v777 = vpack.c.bf16 %v733, %v732
        %v778 = vpack.c.bf16 %v735, %v734
        %v779 = vpack.c.bf16 %v737, %v736
        %v780 = vpack.c.bf16 %v739, %v738
        %v781 = vpack.c.bf16 %v741, %v740
        %v782 = vpack.c.bf16 %v743, %v742
        %v783 = vpack.c.bf16 %v745, %v744
        %v784 = vpack.c.bf16 %v747, %v746
        %v785 = vpack.c.bf16 %v749, %v748
        %v786 = vpack.c.bf16 %v751, %v750
        %v787 = vpack.c.bf16 %v753, %v752
        %v788 = vpack.c.bf16 %v755, %v754
        %v789 = vpack.c.bf16 %v757, %v756
        %v790 = vld [vmem:[%s3] sm:$0xf]
        %v791 = vld [vmem:[%s3 + $0x4] sm:$0xf]
        %v792 = vld [vmem:[%s3 + $0x8] sm:$0xf]
        %v793 = vld [vmem:[%s3 + $0xc] sm:$0xf]
        %v794 = vld [vmem:[%s3 + $0x10] sm:$0xf]
        %v795 = vld [vmem:[%s3 + $0x14] sm:$0xf]
        %v796 = vld [vmem:[%s3 + $0x18] sm:$0xf]
        %v797 = vld [vmem:[%s3 + $0x1c] sm:$0xf]
        %v798 = vld [vmem:[%s3 + $0x20] sm:$0xf]
        %v799 = vld [vmem:[%s3 + $0x24] sm:$0xf]
        %v800 = vld [vmem:[%s3 + $0x28] sm:$0xf]
        %v801 = vld [vmem:[%s3 + $0x2c] sm:$0xf]
        %v802 = vld [vmem:[%s3 + $0x30] sm:$0xf]
        %v803 = vld [vmem:[%s3 + $0x34] sm:$0xf]
        %v804 = vld [vmem:[%s3 + $0x38] sm:$0xf]
        %v805 = vld [vmem:[%s3 + $0x3c] sm:$0xf]
        %v806 = vld [vmem:[%s4] sm:$0x1]
        %v808 = vperm.slane %v806, 0
        %v826 = vunpack.c.l.b16 %v790
        %v827 = vunpack.c.l.b16 %v791
        %v828 = vunpack.c.l.b16 %v792
        %v829 = vunpack.c.l.b16 %v793
        %v830 = vunpack.c.l.b16 %v794
        %v831 = vunpack.c.l.b16 %v795
        %v832 = vunpack.c.l.b16 %v796
        %v833 = vunpack.c.l.b16 %v797
        %v834 = vunpack.c.l.b16 %v798
        %v835 = vunpack.c.l.b16 %v799
        %v836 = vunpack.c.l.b16 %v800
        %v837 = vunpack.c.l.b16 %v801
        %v838 = vunpack.c.l.b16 %v802
        %v839 = vunpack.c.l.b16 %v803
        %v840 = vunpack.c.l.b16 %v804
        %v841 = vunpack.c.l.b16 %v805
        %v842 = vpack.c.b16 %v827, %v826
        %v843 = vpack.c.b16 %v829, %v828
        %v844 = vpack.c.b16 %v831, %v830
        %v845 = vpack.c.b16 %v833, %v832
        %v846 = vpack.c.b16 %v835, %v834
        %v847 = vpack.c.b16 %v837, %v836
        %v848 = vpack.c.b16 %v839, %v838
        %v849 = vpack.c.b16 %v841, %v840
        %858 = vmatpush.bf16.msra.mxu0 %v849
        %859 = vmatpush.bf16.msra.mxu0 %v848
        %860 = vmatpush.bf16.msra.mxu0 %v847
        %861 = vmatpush.bf16.msra.mxu0 %v846
        %862 = vmatpush.bf16.msra.mxu0 %v845
        %863 = vmatpush.bf16.msra.mxu0 %v844
        %864 = vmatpush.bf16.msra.mxu0 %v843
        %865 = vmatpush.bf16.msra.mxu0 %v842
        %866 = vmatmul.bf16.gmra.mxu0 %v758
        %v867 = vpop.f32.mrf.mxu0
        %v868 = vadd.f32 %v808, %v867
        %v869 = vpop.f32.mrf.mxu0
        %v870 = vadd.f32 %v808, %v869
        %871 = vmatmul.bf16.gmra.mxu0 %v759
        %v872 = vpop.f32.mrf.mxu0
        %v873 = vadd.f32 %v808, %v872
        %v874 = vpop.f32.mrf.mxu0
        %v875 = vadd.f32 %v808, %v874
        %876 = vmatmul.bf16.gmra.mxu0 %v760
        %v877 = vpop.f32.mrf.mxu0
        %v878 = vadd.f32 %v808, %v877
        %v879 = vpop.f32.mrf.mxu0
        %v880 = vadd.f32 %v808, %v879
        %881 = vmatmul.bf16.gmra.mxu0 %v761
        %v882 = vpop.f32.mrf.mxu0
        %v883 = vadd.f32 %v808, %v882
        %v884 = vpop.f32.mrf.mxu0
        %v885 = vadd.f32 %v808, %v884
        %886 = vmatmul.bf16.gmra.mxu0 %v762
        %v887 = vpop.f32.mrf.mxu0
        %v888 = vadd.f32 %v808, %v887
        %v889 = vpop.f32.mrf.mxu0
        %v890 = vadd.f32 %v808, %v889
        %891 = vmatmul.bf16.gmra.mxu0 %v763
        %v892 = vpop.f32.mrf.mxu0
        %v893 = vadd.f32 %v808, %v892
        %v894 = vpop.f32.mrf.mxu0
        %v895 = vadd.f32 %v808, %v894
        %896 = vmatmul.bf16.gmra.mxu0 %v764
        %v897 = vpop.f32.mrf.mxu0
        %v898 = vadd.f32 %v808, %v897
        %v899 = vpop.f32.mrf.mxu0
        %v900 = vadd.f32 %v808, %v899
        %901 = vmatmul.bf16.gmra.mxu0 %v765
        %v902 = vpop.f32.mrf.mxu0
        %v903 = vadd.f32 %v808, %v902
        %v904 = vpop.f32.mrf.mxu0
        %v905 = vadd.f32 %v808, %v904
        %906 = vmatmul.bf16.gmra.mxu0 %v766
        %v907 = vpop.f32.mrf.mxu0
        %v908 = vadd.f32 %v808, %v907
        %v909 = vpop.f32.mrf.mxu0
        %v910 = vadd.f32 %v808, %v909
        %911 = vmatmul.bf16.gmra.mxu0 %v767
        %v912 = vpop.f32.mrf.mxu0
        %v913 = vadd.f32 %v808, %v912
        %v914 = vpop.f32.mrf.mxu0
        %v915 = vadd.f32 %v808, %v914
        %916 = vmatmul.bf16.gmra.mxu0 %v768
        %v917 = vpop.f32.mrf.mxu0
        %v918 = vadd.f32 %v808, %v917
        %v919 = vpop.f32.mrf.mxu0
        %v920 = vadd.f32 %v808, %v919
        %921 = vmatmul.bf16.gmra.mxu0 %v769
        %v922 = vpop.f32.mrf.mxu0
        %v923 = vadd.f32 %v808, %v922
        %v924 = vpop.f32.mrf.mxu0
        %v925 = vadd.f32 %v808, %v924
        %926 = vmatmul.bf16.gmra.mxu0 %v770
        %v927 = vpop.f32.mrf.mxu0
        %v928 = vadd.f32 %v808, %v927
        %v929 = vpop.f32.mrf.mxu0
        %v930 = vadd.f32 %v808, %v929
        %931 = vmatmul.bf16.gmra.mxu0 %v771
        %v932 = vpop.f32.mrf.mxu0
        %v933 = vadd.f32 %v808, %v932
        %v934 = vpop.f32.mrf.mxu0
        %v935 = vadd.f32 %v808, %v934
        %936 = vmatmul.bf16.gmra.mxu0 %v772
        %v937 = vpop.f32.mrf.mxu0
        %v938 = vadd.f32 %v808, %v937
        %v939 = vpop.f32.mrf.mxu0
        %v940 = vadd.f32 %v808, %v939
        %941 = vmatmul.bf16.gmra.mxu0 %v773
        %v942 = vpop.f32.mrf.mxu0
        %v943 = vadd.f32 %v808, %v942
        %v944 = vpop.f32.mrf.mxu0
        %v945 = vadd.f32 %v808, %v944
        %946 = vmatmul.bf16.gmra.mxu0 %v774
        %v947 = vpop.f32.mrf.mxu0
        %v948 = vadd.f32 %v808, %v947
        %v949 = vpop.f32.mrf.mxu0
        %v950 = vadd.f32 %v808, %v949
        %951 = vmatmul.bf16.gmra.mxu0 %v775
        %v952 = vpop.f32.mrf.mxu0
        %v953 = vadd.f32 %v808, %v952
        %v954 = vpop.f32.mrf.mxu0
        %v955 = vadd.f32 %v808, %v954
        %956 = vmatmul.bf16.gmra.mxu0 %v776
        %v957 = vpop.f32.mrf.mxu0
        %v958 = vadd.f32 %v808, %v957
        %v959 = vpop.f32.mrf.mxu0
        %v960 = vadd.f32 %v808, %v959
        %961 = vmatmul.bf16.gmra.mxu0 %v777
        %v962 = vpop.f32.mrf.mxu0
        %v963 = vadd.f32 %v808, %v962
        %v964 = vpop.f32.mrf.mxu0
        %v965 = vadd.f32 %v808, %v964
        %966 = vmatmul.bf16.gmra.mxu0 %v778
        %v967 = vpop.f32.mrf.mxu0
        %v968 = vadd.f32 %v808, %v967
        %v969 = vpop.f32.mrf.mxu0
        %v970 = vadd.f32 %v808, %v969
        %971 = vmatmul.bf16.gmra.mxu0 %v779
        %v972 = vpop.f32.mrf.mxu0
        %v973 = vadd.f32 %v808, %v972
        %v974 = vpop.f32.mrf.mxu0
        %v975 = vadd.f32 %v808, %v974
        %976 = vmatmul.bf16.gmra.mxu0 %v780
        %v977 = vpop.f32.mrf.mxu0
        %v978 = vadd.f32 %v808, %v977
        %v979 = vpop.f32.mrf.mxu0
        %v980 = vadd.f32 %v808, %v979
        %981 = vmatmul.bf16.gmra.mxu0 %v781
        %v982 = vpop.f32.mrf.mxu0
        %v983 = vadd.f32 %v808, %v982
        %v984 = vpop.f32.mrf.mxu0
        %v985 = vadd.f32 %v808, %v984
        %986 = vmatmul.bf16.gmra.mxu0 %v782
        %v987 = vpop.f32.mrf.mxu0
        %v988 = vadd.f32 %v808, %v987
        %v989 = vpop.f32.mrf.mxu0
        %v990 = vadd.f32 %v808, %v989
        %991 = vmatmul.bf16.gmra.mxu0 %v783
        %v992 = vpop.f32.mrf.mxu0
        %v993 = vadd.f32 %v808, %v992
        %v994 = vpop.f32.mrf.mxu0
        %v995 = vadd.f32 %v808, %v994
        %996 = vmatmul.bf16.gmra.mxu0 %v784
        %v997 = vpop.f32.mrf.mxu0
        %v998 = vadd.f32 %v808, %v997
        %v999 = vpop.f32.mrf.mxu0
        %v1000 = vadd.f32 %v808, %v999
        %1001 = vmatmul.bf16.gmra.mxu0 %v785
        %v1002 = vpop.f32.mrf.mxu0
        %v1003 = vadd.f32 %v808, %v1002
        %v1004 = vpop.f32.mrf.mxu0
        %v1005 = vadd.f32 %v808, %v1004
        %1006 = vmatmul.bf16.gmra.mxu0 %v786
        %v1007 = vpop.f32.mrf.mxu0
        %v1008 = vadd.f32 %v808, %v1007
        %v1009 = vpop.f32.mrf.mxu0
        %v1010 = vadd.f32 %v808, %v1009
        %1011 = vmatmul.bf16.gmra.mxu0 %v787
        %v1012 = vpop.f32.mrf.mxu0
        %v1013 = vadd.f32 %v808, %v1012
        %v1014 = vpop.f32.mrf.mxu0
        %v1015 = vadd.f32 %v808, %v1014
        %1016 = vmatmul.bf16.gmra.mxu0 %v788
        %v1017 = vpop.f32.mrf.mxu0
        %v1018 = vadd.f32 %v808, %v1017
        %v1019 = vpop.f32.mrf.mxu0
        %v1020 = vadd.f32 %v808, %v1019
        %1021 = vmatmul.bf16.gmra.mxu0 %v789
        %v1022 = vpop.f32.mrf.mxu0
        %v1023 = vadd.f32 %v808, %v1022
        %v1024 = vpop.f32.mrf.mxu0
        %v1025 = vadd.f32 %v808, %v1024
        %1026 = vdwg.mxu0
        %v1027 = vmax.f32 %v868, 0.0
        %v1028 = vmax.f32 %v870, 0.0
        %v1029 = vmax.f32 %v873, 0.0
        %v1030 = vmax.f32 %v875, 0.0
        %v1031 = vmax.f32 %v878, 0.0
        %v1032 = vmax.f32 %v880, 0.0
        %v1033 = vmax.f32 %v883, 0.0
        %v1034 = vmax.f32 %v885, 0.0
        %v1035 = vmax.f32 %v888, 0.0
        %v1036 = vmax.f32 %v890, 0.0
        %v1037 = vmax.f32 %v893, 0.0
        %v1038 = vmax.f32 %v895, 0.0
        %v1039 = vmax.f32 %v898, 0.0
        %v1040 = vmax.f32 %v900, 0.0
        %v1041 = vmax.f32 %v903, 0.0
        %v1042 = vmax.f32 %v905, 0.0
        %v1043 = vmax.f32 %v908, 0.0
        %v1044 = vmax.f32 %v910, 0.0
        %v1045 = vmax.f32 %v913, 0.0
        %v1046 = vmax.f32 %v915, 0.0
        %v1047 = vmax.f32 %v918, 0.0
        %v1048 = vmax.f32 %v920, 0.0
        %v1049 = vmax.f32 %v923, 0.0
        %v1050 = vmax.f32 %v925, 0.0
        %v1051 = vmax.f32 %v928, 0.0
        %v1052 = vmax.f32 %v930, 0.0
        %v1053 = vmax.f32 %v933, 0.0
        %v1054 = vmax.f32 %v935, 0.0
        %v1055 = vmax.f32 %v938, 0.0
        %v1056 = vmax.f32 %v940, 0.0
        %v1057 = vmax.f32 %v943, 0.0
        %v1058 = vmax.f32 %v945, 0.0
        %v1059 = vmax.f32 %v948, 0.0
        %v1060 = vmax.f32 %v950, 0.0
        %v1061 = vmax.f32 %v953, 0.0
        %v1062 = vmax.f32 %v955, 0.0
        %v1063 = vmax.f32 %v958, 0.0
        %v1064 = vmax.f32 %v960, 0.0
        %v1065 = vmax.f32 %v963, 0.0
        %v1066 = vmax.f32 %v965, 0.0
        %v1067 = vmax.f32 %v968, 0.0
        %v1068 = vmax.f32 %v970, 0.0
        %v1069 = vmax.f32 %v973, 0.0
        %v1070 = vmax.f32 %v975, 0.0
        %v1071 = vmax.f32 %v978, 0.0
        %v1072 = vmax.f32 %v980, 0.0
        %v1073 = vmax.f32 %v983, 0.0
        %v1074 = vmax.f32 %v985, 0.0
        %v1075 = vmax.f32 %v988, 0.0
        %v1076 = vmax.f32 %v990, 0.0
        %v1077 = vmax.f32 %v993, 0.0
        %v1078 = vmax.f32 %v995, 0.0
        %v1079 = vmax.f32 %v998, 0.0
        %v1080 = vmax.f32 %v1000, 0.0
        %v1081 = vmax.f32 %v1003, 0.0
        %v1082 = vmax.f32 %v1005, 0.0
        %v1083 = vmax.f32 %v1008, 0.0
        %v1084 = vmax.f32 %v1010, 0.0
        %v1085 = vmax.f32 %v1013, 0.0
        %v1086 = vmax.f32 %v1015, 0.0
        %v1087 = vmax.f32 %v1018, 0.0
        %v1088 = vmax.f32 %v1020, 0.0
        %v1089 = vmax.f32 %v1023, 0.0
        %v1090 = vmax.f32 %v1025, 0.0
        %v1091 = vld [vmem:[%s5] sm:$0x3]
        %v1092 = vpack.c.bf16 %v1028, %v1027
        %v1093 = vpack.c.bf16 %v1030, %v1029
        %v1094 = vpack.c.bf16 %v1032, %v1031
        %v1095 = vpack.c.bf16 %v1034, %v1033
        %v1096 = vpack.c.bf16 %v1036, %v1035
        %v1097 = vpack.c.bf16 %v1038, %v1037
        %v1098 = vpack.c.bf16 %v1040, %v1039
        %v1099 = vpack.c.bf16 %v1042, %v1041
        %v1100 = vpack.c.bf16 %v1044, %v1043
        %v1101 = vpack.c.bf16 %v1046, %v1045
        %v1102 = vpack.c.bf16 %v1048, %v1047
        %v1103 = vpack.c.bf16 %v1050, %v1049
        %v1104 = vpack.c.bf16 %v1052, %v1051
        %v1105 = vpack.c.bf16 %v1054, %v1053
        %v1106 = vpack.c.bf16 %v1056, %v1055
        %v1107 = vpack.c.bf16 %v1058, %v1057
        %v1108 = vpack.c.bf16 %v1060, %v1059
        %v1109 = vpack.c.bf16 %v1062, %v1061
        %v1110 = vpack.c.bf16 %v1064, %v1063
        %v1111 = vpack.c.bf16 %v1066, %v1065
        %v1112 = vpack.c.bf16 %v1068, %v1067
        %v1113 = vpack.c.bf16 %v1070, %v1069
        %v1114 = vpack.c.bf16 %v1072, %v1071
        %v1115 = vpack.c.bf16 %v1074, %v1073
        %v1116 = vpack.c.bf16 %v1076, %v1075
        %v1117 = vpack.c.bf16 %v1078, %v1077
        %v1118 = vpack.c.bf16 %v1080, %v1079
        %v1119 = vpack.c.bf16 %v1082, %v1081
        %v1120 = vpack.c.bf16 %v1084, %v1083
        %v1121 = vpack.c.bf16 %v1086, %v1085
        %v1122 = vpack.c.bf16 %v1088, %v1087
        %v1123 = vpack.c.bf16 %v1090, %v1089
        %v1124 = vld [vmem:[%s6] sm:$0xf]
        %1126 = vset.pattern.permute.xlu0 0
        %1127 = vperm.xlu0 %1126, %v1124
        %v1128 = vpop.permute.xlu0 %1127
        %1130 = vmatpush.bf16.xpose.msra.mxu0 %v1099
        %1131 = vmatpush.bf16.xpose.msra.mxu0 %v1098
        %1132 = vmatpush.bf16.xpose.msra.mxu0 %v1097
        %1133 = vmatpush.bf16.xpose.msra.mxu0 %v1096
        %1134 = vmatpush.bf16.xpose.msra.mxu0 %v1095
        %1135 = vmatpush.bf16.xpose.msra.mxu0 %v1094
        %1136 = vmatpush.bf16.xpose.msra.mxu0 %v1093
        %1137 = vmatpush.bf16.xpose.msra.mxu0 %v1092
        %1138 = vmatmul.bf16.gmra.mxu0 %v1091
        %v1139 = vpop.f32.mrf.mxu0
        %v1140 = vadd.f32 %v1128, %v1139
        %v1141 = vpop.f32.mrf.mxu0
        %1142 = vdwg.mxu0
        %1143 = vmatpush.bf16.xpose.msra.mxu0 %v1107
        %1144 = vmatpush.bf16.xpose.msra.mxu0 %v1106
        %1145 = vmatpush.bf16.xpose.msra.mxu0 %v1105
        %1146 = vmatpush.bf16.xpose.msra.mxu0 %v1104
        %1147 = vmatpush.bf16.xpose.msra.mxu0 %v1103
        %1148 = vmatpush.bf16.xpose.msra.mxu0 %v1102
        %1149 = vmatpush.bf16.xpose.msra.mxu0 %v1101
        %1150 = vmatpush.bf16.xpose.msra.mxu0 %v1100
        %1151 = vmatmul.bf16.gmra.mxu0 %v1091
        %v1152 = vpop.f32.mrf.mxu0
        %v1153 = vadd.f32 %v1128, %v1152
        %v1154 = vpop.f32.mrf.mxu0
        %1155 = vdwg.mxu0
        %1156 = vmatpush.bf16.xpose.msra.mxu0 %v1115
        %1157 = vmatpush.bf16.xpose.msra.mxu0 %v1114
        %1158 = vmatpush.bf16.xpose.msra.mxu0 %v1113
        %1159 = vmatpush.bf16.xpose.msra.mxu0 %v1112
        %1160 = vmatpush.bf16.xpose.msra.mxu0 %v1111
        %1161 = vmatpush.bf16.xpose.msra.mxu0 %v1110
        %1162 = vmatpush.bf16.xpose.msra.mxu0 %v1109
        %1163 = vmatpush.bf16.xpose.msra.mxu0 %v1108
        %1164 = vmatmul.bf16.gmra.mxu0 %v1091
        %v1165 = vpop.f32.mrf.mxu0
        %v1166 = vadd.f32 %v1128, %v1165
        %v1167 = vpop.f32.mrf.mxu0
        %1168 = vdwg.mxu0
        %1169 = vmatpush.bf16.xpose.msra.mxu0 %v1123
        %1170 = vmatpush.bf16.xpose.msra.mxu0 %v1122
        %1171 = vmatpush.bf16.xpose.msra.mxu0 %v1121
        %1172 = vmatpush.bf16.xpose.msra.mxu0 %v1120
        %1173 = vmatpush.bf16.xpose.msra.mxu0 %v1119
        %1174 = vmatpush.bf16.xpose.msra.mxu0 %v1118
        %1175 = vmatpush.bf16.xpose.msra.mxu0 %v1117
        %1176 = vmatpush.bf16.xpose.msra.mxu0 %v1116
        %1177 = vmatmul.bf16.gmra.mxu0 %v1091
        %v1178 = vpop.f32.mrf.mxu0
        %v1179 = vadd.f32 %v1128, %v1178
        %v1180 = vpop.f32.mrf.mxu0
        %1181 = vdwg.mxu0
        %v1186 = vrot.slane %v1153, 4
        %v1187 = vrot.slane %v1179, 4
        %v1188 = vsel %vm519, %v1140, %v1186
        %v1189 = vsel %vm519, %v1166, %v1187
        %1192 = vst [vmem:[%s284] sm:$0xff] %v1188
        %1193 = vst [vmem:[%s284 + $0x8] sm:$0xff] %v1189
        %s1194 = sand.u32 %s181, 1
        %s1195 = scalar_lea.sflag [#allocation3], %s1194
        %s1196 = sand.u32 %s181, 1
        %s1197 = smul.addr %s1196, 16
        %s1198 = scalar_lea.vmem [#allocation2], %s1197
        // Predicated region
        $region49: #{very_tiny_nerf_forward.1} parent=47 // pred_check
          %p1199 = pneg %p191
        $region50: #{very_tiny_nerf_forward.1} parent=47 // pred_check_branch
          %1201 = sbr.rel (%p1199) target = $region52
        $region51: #{very_tiny_nerf_forward.1} parent=47 // pred_region
          %s1202 = smul.u32 4, %s21
          %1204 = vsyncadd %s1195, 0
          %s1205 = smul.addr %s1202, 4
          %s1206 = scalar_lea.hbm %s7, %s1205
          %s1208 = sshll.u32 %s1198, 4
          %s1209 = int_to_ptr.vmem [resolvable:$true] %s1208
          %s1210 = sshll.u32 %s1206, 4
          %s1211 = int_to_ptr.hbm [resolvable:$true] %s1210
          %1213 = dma.vmem_to_hbm [thread:$0]  %s1209, 256, %s1211, %s1195
        $region52: #{very_tiny_nerf_forward.1} parent=47 // pred_fallthru
          _
      $region48: #{very_tiny_nerf_forward.1} parent=5 // pred_fallthru
        _
      %p1214 = scmp.le.s32.totalorder 2, %s16
      // Predicated region
      $region53: #{very_tiny_nerf_forward.1} parent=5 // pred_check
        %p1215 = pneg %p1214
      $region54: #{very_tiny_nerf_forward.1} parent=5 // pred_check_branch
        %1217 = sbr.rel (%p1215) target = $region56
      $region55: #{very_tiny_nerf_forward.1} parent=5 // pred_region
        %s1218 = ssub.s32 %s16, 2
        // Predicated region
        $region57: #{very_tiny_nerf_forward.1} parent=55 // pred_check
          %p1219 = pneg %p197
        $region58: #{very_tiny_nerf_forward.1} parent=55 // pred_check_branch
          %1221 = sbr.rel (%p1219) target = $region60
        $region59: #{very_tiny_nerf_forward.1} parent=55 // pred_region
          %s1222 = sand.u32 %s182, 1
          %s1223 = scalar_lea.sflag [#allocation3], %s1222
          %s1224 = sand.u32 %s182, 1
          %s1225 = smul.addr %s1224, 16
          %s1226 = scalar_lea.vmem [#allocation2], %s1225
          %1228 = dma.done %s1223, 256
        $region60: #{very_tiny_nerf_forward.1} parent=55 // pred_fallthru
          _
      $region56: #{very_tiny_nerf_forward.1} parent=5 // pred_fallthru
        _
    $region6: #{very_tiny_nerf_forward.1} parent=1 // loop_footer
      %s20 = sadd.s32 1, %s16
    $region7: #{very_tiny_nerf_forward.1} parent=1 // loop_footer_branch
      %15 = sbr.rel target = $region3
    $region8: #{very_tiny_nerf_forward.1} parent=1 // loop_exit
      _
    %1229 = vsyncpa [#allocation3], 1
    %s1230 = scalar_lea.sflag [#allocation3], 1
    %1231 = vsyncpa %s1230, 1

</llo_original>
